<compile_context>
chip_gen: v6e
topology: v6e:2x2x1
jax: 0.10.0
libtpu: 0.0.40
codegen_flags: <defaults>
</compile_context>

<pallas_src>
import functools

import jax
import jax.numpy as jnp
from jax import lax
from jax.experimental import pallas as pl
from jax.experimental.pallas import tpu as pltpu

_INV_SQRT2 = 0.7071067811865476


def _round_up(v: int, m: int) -> int:
    return ((v + m - 1) // m) * m


def embed_fc_kernel(x_ref, w1_ref, b1_ref, w2_ref, b2_ref, o_ref):
    # x arrives as f32 (no wrapper cast pass); cast to bf16 on the VPU so the
    # first GEMM takes the bf16-native MXU path, accumulate in f32.
    x = x_ref[...].astype(jnp.bfloat16)
    h = jnp.dot(x, w1_ref[...], preferred_element_type=jnp.float32)
    h = h + b1_ref[...]
    # Exact (erf-based) GELU, matching torch.nn.GELU() default.
    h = 0.5 * h * (1.0 + lax.erf(h * _INV_SQRT2))
    # Second linear: cast activations to bf16 for the MXU, accumulate f32.
    out = jnp.dot(h.astype(w2_ref.dtype), w2_ref[...],
                  preferred_element_type=jnp.float32)
    out = out + b2_ref[...]
    o_ref[...] = out.astype(o_ref.dtype)


def prepare_embed_fc_params(w1, b1, w2, b2):
    """One-time parameter prep: bf16 weight copies + 2-D f32 biases.

    Hoisted out of the per-call jitted path so the weight casts (an extra HBM
    read/write over the weights) happen once per parameter set, not per call.
    """
    emb_dim = w2.shape[1]
    return (jnp.asarray(w1, jnp.bfloat16),
            jnp.asarray(b1, jnp.float32).reshape(1, emb_dim),
            jnp.asarray(w2, jnp.bfloat16),
            jnp.asarray(b2, jnp.float32).reshape(1, emb_dim))


@functools.partial(jax.jit, static_argnames=("tm",))
def embed_fc(x, w1_bf16, b1_2d, w2_bf16, b2_2d, *, tm=None):
    """x: any shape whose trailing dims flatten to input_dim; returns [M, emb_dim] f32."""
    input_dim = w1_bf16.shape[0]
    emb_dim = w2_bf16.shape[1]

    x2d = x.reshape(-1, input_dim).astype(jnp.float32)   # torch: x.view(-1, input_dim)
    m = x2d.shape[0]
    m8 = _round_up(m, 8)

    # Row tile: sublane-aligned, large enough to amortize ~0.35 us/step
    # pipeline overhead, but with >= 2 grid steps whenever M > 8 so the
    # "parallel" M axis can shard across v7x's two TensorCores.
    if tm is None:
        if m8 <= 8:
            tm = 8
        else:
            tm = min(1024, _round_up(pl.cdiv(m8, 2), 8))
    tm = max(8, _round_up(tm, 8))

    # Pad only to the 8-row sublane boundary; the last tile may be ragged.
    if m8 != m:
        x2d = jnp.pad(x2d, ((0, m8 - m), (0, 0)))

    grid = (pl.cdiv(m8, tm),)

    # VMEM budget: double-buffered x/out tiles + (conservatively double-
    # buffered) resident weights + biases, plus slack.
    vmem_bytes = (2 * tm * input_dim * 4          # x tiles (f32, 2 buffers)
                  + 2 * tm * emb_dim * 4          # out tiles (f32, 2 buffers)
                  + 2 * input_dim * emb_dim * 2   # w1 (bf16)
                  + 2 * emb_dim * emb_dim * 2     # w2 (bf16)
                  + 4 * 2 * emb_dim * 4)          # biases
    vmem_limit = int(min(max(vmem_bytes + (8 << 20), 16 << 20), 48 << 20))

    cost = pl.CostEstimate(
        flops=2 * m8 * (input_dim * emb_dim + emb_dim * emb_dim),
        transcendentals=0,   # erf lowers to a VALU polynomial, not the EUP
        bytes_accessed=(m8 * input_dim * 4
                        + input_dim * emb_dim * 2
                        + emb_dim * emb_dim * 2
                        + 2 * emb_dim * 4
                        + m8 * emb_dim * 4),
    )

    out = pl.pallas_call(
        embed_fc_kernel,
        out_shape=jax.ShapeDtypeStruct((m8, emb_dim), jnp.float32),
        grid=grid,
        in_specs=[
            pl.BlockSpec((tm, input_dim), lambda i: (i, 0)),       # x: tiled over M
            pl.BlockSpec((input_dim, emb_dim), lambda i: (0, 0)),  # w1: VMEM-resident
            pl.BlockSpec((1, emb_dim), lambda i: (0, 0)),          # b1: resident
            pl.BlockSpec((emb_dim, emb_dim), lambda i: (0, 0)),    # w2: resident
            pl.BlockSpec((1, emb_dim), lambda i: (0, 0)),          # b2: resident
        ],
        out_specs=pl.BlockSpec((tm, emb_dim), lambda i: (i, 0)),
        compiler_params=pltpu.CompilerParams(
            dimension_semantics=("parallel",),
            vmem_limit_bytes=vmem_limit,
        ),
        cost_estimate=cost,
    )(x2d, w1_bf16, b1_2d, w2_bf16, b2_2d)

    return out[:m]


def reference_embed_fc(x, w1, b1, w2, b2, *, bf16=False):
    """Pure-JAX reference. bf16=True mimics the kernel's bf16 MXU path."""
    input_dim = w1.shape[0]
    x2d = x.reshape(-1, input_dim).astype(jnp.float32)
    if bf16:
        x2d = x2d.astype(jnp.bfloat16)
        w1 = w1.astype(jnp.bfloat16)
        w2 = w2.astype(jnp.bfloat16)
    h = jnp.dot(x2d, w1, preferred_element_type=jnp.float32) + b1
    h = 0.5 * h * (1.0 + lax.erf(h * _INV_SQRT2))
    if bf16:
        h = h.astype(jnp.bfloat16)
    return jnp.dot(h, w2, preferred_element_type=jnp.float32) + b2


if __name__ == "__main__":
    # Shapes consistent with the module: x is [B, C, H, W] = [2, 4, 16, 16]
    # -> input_dim = 4*16*16 = 1024, emb_dim = 128 (lane-aligned).
    B, C, H, W = 2, 4, 16, 16
    input_dim = C * H * W
    emb_dim = 128

    key = jax.random.PRNGKey(0)
    kx, k1, k2, k3, k4 = jax.random.split(key, 5)

    x = jax.random.normal(kx, (B, C, H, W), dtype=jnp.float32)
    # Linear weights stored pre-transposed as [in, out] so kernel does x @ W + b.
    w1 = jax.random.normal(k1, (input_dim, emb_dim), dtype=jnp.float32) * 0.02
    b1 = jax.random.normal(k2, (emb_dim,), dtype=jnp.float32) * 0.02
    w2 = jax.random.normal(k3, (emb_dim, emb_dim), dtype=jnp.float32) * 0.02
    b2 = jax.random.normal(k4, (emb_dim,), dtype=jnp.float32) * 0.02

    # One-time parameter prep (bf16 weights, 2-D biases) — outside the jit.
    params = prepare_embed_fc_params(w1, b1, w2, b2)

    out = embed_fc(x, *params)
    out = jax.block_until_ready(out)
    assert out.shape == (B, emb_dim), out.shape

    # Tight check vs a bf16-consistent reference (same arithmetic as kernel).
    ref_bf16 = reference_embed_fc(x, w1, b1, w2, b2, bf16=True)
    assert jnp.allclose(out, ref_bf16, atol=2e-3, rtol=2e-3), \
        "mismatch vs bf16-path reference"

    # Looser check vs the full-f32 PyTorch-semantics reference (bf16 weight
    # streaming introduces small, bounded rounding error).
    ref_f32 = reference_embed_fc(x, w1, b1, w2, b2, bf16=False)
    assert jnp.allclose(out, ref_f32, atol=5e-2, rtol=5e-2), \
        "mismatch vs f32 reference"

    print("KERNEL_OK")
</pallas_src>

<mosaic_0001>
module attributes {stable_mosaic.version = 11 : i64} {
  func.func @embed_fc_kernel(%arg0: i32, %arg1: memref<8x1024xf32, #tpu.memory_space<vmem>>, %arg2: memref<1024x128xbf16, #tpu.memory_space<vmem>>, %arg3: memref<1x128xf32, #tpu.memory_space<vmem>>, %arg4: memref<128x128xbf16, #tpu.memory_space<vmem>>, %arg5: memref<1x128xf32, #tpu.memory_space<vmem>>, %arg6: memref<8x128xf32, #tpu.memory_space<vmem>>) attributes {dimension_semantics = [#tpu.dimension_semantics<parallel>], iteration_bounds = array<i64: 1>, scalar_prefetch = 0 : i64, scratch_operands = 0 : i64, tpu.core_type = #tpu.core_type<tc>, window_params = [{transform_indices = @transform_0, window_bounds = array<i64: 8, 1024>}, {pipeline_mode = #tpu.pipeline_mode<synchronous>, transform_indices = @transform_1, window_bounds = array<i64: 1024, 128>}, {pipeline_mode = #tpu.pipeline_mode<synchronous>, transform_indices = @transform_2, window_bounds = array<i64: 1, 128>}, {pipeline_mode = #tpu.pipeline_mode<synchronous>, transform_indices = @transform_3, window_bounds = array<i64: 128, 128>}, {pipeline_mode = #tpu.pipeline_mode<synchronous>, transform_indices = @transform_4, window_bounds = array<i64: 1, 128>}, {transform_indices = @transform_5, window_bounds = array<i64: 8, 128>}]} {
    %c0 = arith.constant 0 : index
    %c0_0 = arith.constant 0 : index
    %0 = vector.load %arg1[%c0, %c0_0] : memref<8x1024xf32, #tpu.memory_space<vmem>>, vector<8x1024xf32>
    %1 = arith.truncf %0 : vector<8x1024xf32> to vector<8x1024xbf16>
    %c0_1 = arith.constant 0 : index
    %c0_2 = arith.constant 0 : index
    %2 = vector.load %arg2[%c0_1, %c0_2] : memref<1024x128xbf16, #tpu.memory_space<vmem>>, vector<1024x128xbf16>
    %cst = arith.constant dense<0.000000e+00> : vector<8x128xf32>
    %3 = tpu.matmul %1, %2, %cst {dimension_numbers = #tpu.dot_dimension_numbers<[1], [0], [0], [1], [0, 0, 1, 1], [], []>} : vector<8x1024xbf16>, vector<1024x128xbf16>, vector<8x128xf32> -> vector<8x128xf32>
    %c0_3 = arith.constant 0 : index
    %c0_4 = arith.constant 0 : index
    %4 = vector.load %arg3[%c0_3, %c0_4] : memref<1x128xf32, #tpu.memory_space<vmem>>, vector<1x128xf32>
    %5 = vector.broadcast %4 : vector<1x128xf32> to vector<8x128xf32>
    %6 = arith.addf %3, %5 : vector<8x128xf32>
    %cst_5 = arith.constant 5.000000e-01 : f32
    %7 = vector.broadcast %cst_5 : f32 to vector<8x128xf32>
    %8 = arith.mulf %7, %6 : vector<8x128xf32>
    %cst_6 = arith.constant 0.707106769 : f32
    %9 = vector.broadcast %cst_6 : f32 to vector<8x128xf32>
    %10 = arith.mulf %6, %9 : vector<8x128xf32>
    %11 = math.erf %10 : vector<8x128xf32>
    %cst_7 = arith.constant 1.000000e+00 : f32
    %12 = vector.broadcast %cst_7 : f32 to vector<8x128xf32>
    %13 = arith.addf %12, %11 : vector<8x128xf32>
    %14 = arith.mulf %8, %13 : vector<8x128xf32>
    %15 = arith.truncf %14 : vector<8x128xf32> to vector<8x128xbf16>
    %c0_8 = arith.constant 0 : index
    %c0_9 = arith.constant 0 : index
    %16 = vector.load %arg4[%c0_8, %c0_9] : memref<128x128xbf16, #tpu.memory_space<vmem>>, vector<128x128xbf16>
    %cst_10 = arith.constant dense<0.000000e+00> : vector<8x128xf32>
    %17 = tpu.matmul %15, %16, %cst_10 {dimension_numbers = #tpu.dot_dimension_numbers<[1], [0], [0], [1], [0, 0, 1, 1], [], []>} : vector<8x128xbf16>, vector<128x128xbf16>, vector<8x128xf32> -> vector<8x128xf32>
    %c0_11 = arith.constant 0 : index
    %c0_12 = arith.constant 0 : index
    %18 = vector.load %arg5[%c0_11, %c0_12] : memref<1x128xf32, #tpu.memory_space<vmem>>, vector<1x128xf32>
    %19 = vector.broadcast %18 : vector<1x128xf32> to vector<8x128xf32>
    %20 = arith.addf %17, %19 : vector<8x128xf32>
    %c0_13 = arith.constant 0 : index
    %c0_14 = arith.constant 0 : index
    %21 = vector.load %arg6[%c0_13, %c0_14] : memref<8x128xf32, #tpu.memory_space<vmem>>, vector<8x128xf32>
    tpu.vector_store %arg6[%c0_13, %c0_14], %20 {strides = array<i32>} : memref<8x128xf32, #tpu.memory_space<vmem>>, vector<8x128xf32>,
    return
  }
  func.func @transform_0(%arg0: i32) -> (i32, i32) {
    %c0_i32 = arith.constant 0 : i32
    %c0_i32_0 = arith.constant 0 : i32
    return %arg0, %c0_i32 : i32, i32
  }
  func.func @transform_1(%arg0: i32) -> (i32, i32) {
    %c0_i32 = arith.constant 0 : i32
    %c0_i32_0 = arith.constant 0 : i32
    %c0_i32_1 = arith.constant 0 : i32
    return %c0_i32, %c0_i32_0 : i32, i32
  }
  func.func @transform_2(%arg0: i32) -> (i32, i32) {
    %c0_i32 = arith.constant 0 : i32
    %c0_i32_0 = arith.constant 0 : i32
    %c0_i32_1 = arith.constant 0 : i32
    return %c0_i32, %c0_i32_0 : i32, i32
  }
  func.func @transform_3(%arg0: i32) -> (i32, i32) {
    %c0_i32 = arith.constant 0 : i32
    %c0_i32_0 = arith.constant 0 : i32
    %c0_i32_1 = arith.constant 0 : i32
    return %c0_i32, %c0_i32_0 : i32, i32
  }
  func.func @transform_4(%arg0: i32) -> (i32, i32) {
    %c0_i32 = arith.constant 0 : i32
    %c0_i32_0 = arith.constant 0 : i32
    %c0_i32_1 = arith.constant 0 : i32
    return %c0_i32, %c0_i32_0 : i32, i32
  }
  func.func @transform_5(%arg0: i32) -> (i32, i32) {
    %c0_i32 = arith.constant 0 : i32
    %c0_i32_0 = arith.constant 0 : i32
    return %arg0, %c0_i32 : i32, i32
  }
}

</mosaic_0001>

<llo_original>
// kernel: embed_fc.1
$region0: #{embed_fc.1}
  #allocation0 [shape = 'u32[]', space=smem, size = 0x4, offset = 0x4, fixed_abs, tag = 'smem constant byte address 0x4 - core index']
  #allocation1 [shape = 'u32[144,128]{1,0:T(1,128)}', space=vmem, size = 0x12000, scoped, tag = 'internal scratch']
  %s0 = inlined_call_operand.vmem [shape: f32[8,1024], index: 0, kind: input, shape index: {}]
  %s1 = inlined_call_operand.hbm [shape: bf16[1024,128], index: 1, kind: input, shape index: {}]
  %s2 = inlined_call_operand.vmem [shape: f32[1,128], index: 2, kind: input, shape index: {}]
  %s3 = inlined_call_operand.vmem [shape: bf16[128,128], index: 3, kind: input, shape index: {}]
  %s4 = inlined_call_operand.vmem [shape: f32[1,128], index: 4, kind: input, shape index: {}]
  %s5 = inlined_call_operand.vmem [shape: f32[8,128], index: 5, kind: output, shape index: {}]
  %s6 = sld [smem:[#allocation0]]
  $region34: #{embed_fc.1} parent=0
    _
  %s8 = ssub.s32 1, %s6
  %s9 = scalar_select 0, %s8, %s6
  $region1: #{embed_fc.1} parent=0
    #allocation2 [shape = 'u8[262144]{0}', space=vmem, size = 0x40000, scoped, tag = 'input window, operand 1, single buffered']
    #allocation3 [shape = 's32[1]{0}', space=sflag, size = 0x4, scoped, tag = 'scoped memory for embed_fc.1']
    %10 = vsyncpa [#allocation3], 0
    // Predicated region
    $region2: #{embed_fc.1} parent=1 // pred_check
      _
    $region3: #{embed_fc.1} parent=1 // pred_check_branch
      %12 = sbr.rel (0) target = $region5
    $region4: #{embed_fc.1} parent=1 // pred_region
      _
    $region5: #{embed_fc.1} parent=1 // pred_fallthru
      _
    // Predicated region
    $region6: #{embed_fc.1} parent=1 // pred_check
      _
    $region7: #{embed_fc.1} parent=1 // pred_check_branch
      %14 = sbr.rel (0) target = $region9
    $region8: #{embed_fc.1} parent=1 // pred_region
      %s16 = ssub.s32 8192, 8192
      %17 = vsyncadd [#allocation3], %s16
      %s18 = sshll.u32 [#allocation2], 4
      %s19 = int_to_ptr.vmem [resolvable:$true] %s18
      %24 = dma.hbm_to_vmem [thread:$0]  %s1, 8192, %s19, [#allocation3], 64, 64, 4
    $region9: #{embed_fc.1} parent=1 // pred_fallthru
      _
    // Predicated region
    $region10: #{embed_fc.1} parent=1 // pred_check
      _
    $region11: #{embed_fc.1} parent=1 // pred_check_branch
      %26 = sbr.rel (0) target = $region13
    $region12: #{embed_fc.1} parent=1 // pred_region
      _
    $region13: #{embed_fc.1} parent=1 // pred_fallthru
      _
    // Predicated region
    $region14: #{embed_fc.1} parent=1 // pred_check
      _
    $region15: #{embed_fc.1} parent=1 // pred_check_branch
      %28 = sbr.rel (0) target = $region17
    $region16: #{embed_fc.1} parent=1 // pred_region
      _
    $region17: #{embed_fc.1} parent=1 // pred_fallthru
      _
    // Predicated region
    $region18: #{embed_fc.1} parent=1 // pred_check
      _
    $region19: #{embed_fc.1} parent=1 // pred_check_branch
      %30 = sbr.rel (0) target = $region21
    $region20: #{embed_fc.1} parent=1 // pred_region
      _
    $region21: #{embed_fc.1} parent=1 // pred_fallthru
      _
    // Predicated region
    $region22: #{embed_fc.1} parent=1 // pred_check
      _
    $region23: #{embed_fc.1} parent=1 // pred_check_branch
      %32 = sbr.rel (0) target = $region25
    $region24: #{embed_fc.1} parent=1 // pred_region
      %33 = dma.done [#allocation3], 8192
    $region25: #{embed_fc.1} parent=1 // pred_fallthru
      _
    %v35 = vld [vmem:[%s0] sm:$0xff]
    %v36 = vld [vmem:[%s0 + $0x8] sm:$0xff]
    %v37 = vld [vmem:[%s0 + $0x10] sm:$0xff]
    %v38 = vld [vmem:[%s0 + $0x18] sm:$0xff]
    %v39 = vld [vmem:[%s0 + $0x20] sm:$0xff]
    %v40 = vld [vmem:[%s0 + $0x28] sm:$0xff]
    %v41 = vld [vmem:[%s0 + $0x30] sm:$0xff]
    %v42 = vld [vmem:[%s0 + $0x38] sm:$0xff]
    %v43 = vpack.c.bf16 %v35, %v35
    %v44 = vpack.c.bf16 %v36, %v36
    %v45 = vpack.c.bf16 %v37, %v37
    %v46 = vpack.c.bf16 %v38, %v38
    %v47 = vpack.c.bf16 %v39, %v39
    %v48 = vpack.c.bf16 %v40, %v40
    %v49 = vpack.c.bf16 %v41, %v41
    %v50 = vpack.c.bf16 %v42, %v42
    %v51 = vld [vmem:[#allocation2] sm:$0xf]
    %v52 = vld [vmem:[#allocation2 + $0x4] sm:$0xf]
    %v53 = vld [vmem:[#allocation2 + $0x8] sm:$0xf]
    %v54 = vld [vmem:[#allocation2 + $0xc] sm:$0xf]
    %v55 = vld [vmem:[#allocation2 + $0x10] sm:$0xf]
    %v56 = vld [vmem:[#allocation2 + $0x14] sm:$0xf]
    %v57 = vld [vmem:[#allocation2 + $0x18] sm:$0xf]
    %v58 = vld [vmem:[#allocation2 + $0x1c] sm:$0xf]
    %v59 = vld [vmem:[#allocation2 + $0x20] sm:$0xf]
    %v60 = vld [vmem:[#allocation2 + $0x24] sm:$0xf]
    %v61 = vld [vmem:[#allocation2 + $0x28] sm:$0xf]
    %v62 = vld [vmem:[#allocation2 + $0x2c] sm:$0xf]
    %v63 = vld [vmem:[#allocation2 + $0x30] sm:$0xf]
    %v64 = vld [vmem:[#allocation2 + $0x34] sm:$0xf]
    %v65 = vld [vmem:[#allocation2 + $0x38] sm:$0xf]
    %v66 = vld [vmem:[#allocation2 + $0x3c] sm:$0xf]
    %v67 = vld [vmem:[#allocation2 + $0x40] sm:$0xf]
    %v68 = vld [vmem:[#allocation2 + $0x44] sm:$0xf]
    %v69 = vld [vmem:[#allocation2 + $0x48] sm:$0xf]
    %v70 = vld [vmem:[#allocation2 + $0x4c] sm:$0xf]
    %v71 = vld [vmem:[#allocation2 + $0x50] sm:$0xf]
    %v72 = vld [vmem:[#allocation2 + $0x54] sm:$0xf]
    %v73 = vld [vmem:[#allocation2 + $0x58] sm:$0xf]
    %v74 = vld [vmem:[#allocation2 + $0x5c] sm:$0xf]
    %v75 = vld [vmem:[#allocation2 + $0x60] sm:$0xf]
    %v76 = vld [vmem:[#allocation2 + $0x64] sm:$0xf]
    %v77 = vld [vmem:[#allocation2 + $0x68] sm:$0xf]
    %v78 = vld [vmem:[#allocation2 + $0x6c] sm:$0xf]
    %v79 = vld [vmem:[#allocation2 + $0x70] sm:$0xf]
    %v80 = vld [vmem:[#allocation2 + $0x74] sm:$0xf]
    %v81 = vld [vmem:[#allocation2 + $0x78] sm:$0xf]
    %v82 = vld [vmem:[#allocation2 + $0x7c] sm:$0xf]
    %v83 = vld [vmem:[#allocation2 + $0x80] sm:$0xf]
    %v84 = vld [vmem:[#allocation2 + $0x84] sm:$0xf]
    %v85 = vld [vmem:[#allocation2 + $0x88] sm:$0xf]
    %v86 = vld [vmem:[#allocation2 + $0x8c] sm:$0xf]
    %v87 = vld [vmem:[#allocation2 + $0x90] sm:$0xf]
    %v88 = vld [vmem:[#allocation2 + $0x94] sm:$0xf]
    %v89 = vld [vmem:[#allocation2 + $0x98] sm:$0xf]
    %v90 = vld [vmem:[#allocation2 + $0x9c] sm:$0xf]
    %v91 = vld [vmem:[#allocation2 + $0xa0] sm:$0xf]
    %v92 = vld [vmem:[#allocation2 + $0xa4] sm:$0xf]
    %v93 = vld [vmem:[#allocation2 + $0xa8] sm:$0xf]
    %v94 = vld [vmem:[#allocation2 + $0xac] sm:$0xf]
    %v95 = vld [vmem:[#allocation2 + $0xb0] sm:$0xf]
    %v96 = vld [vmem:[#allocation2 + $0xb4] sm:$0xf]
    %v97 = vld [vmem:[#allocation2 + $0xb8] sm:$0xf]
    %v98 = vld [vmem:[#allocation2 + $0xbc] sm:$0xf]
    %v99 = vld [vmem:[#allocation2 + $0xc0] sm:$0xf]
    %v100 = vld [vmem:[#allocation2 + $0xc4] sm:$0xf]
    %v101 = vld [vmem:[#allocation2 + $0xc8] sm:$0xf]
    %v102 = vld [vmem:[#allocation2 + $0xcc] sm:$0xf]
    %v103 = vld [vmem:[#allocation2 + $0xd0] sm:$0xf]
    %v104 = vld [vmem:[#allocation2 + $0xd4] sm:$0xf]
    %v105 = vld [vmem:[#allocation2 + $0xd8] sm:$0xf]
    %v106 = vld [vmem:[#allocation2 + $0xdc] sm:$0xf]
    %v107 = vld [vmem:[#allocation2 + $0xe0] sm:$0xf]
    %v108 = vld [vmem:[#allocation2 + $0xe4] sm:$0xf]
    %v109 = vld [vmem:[#allocation2 + $0xe8] sm:$0xf]
    %v110 = vld [vmem:[#allocation2 + $0xec] sm:$0xf]
    %v111 = vld [vmem:[#allocation2 + $0xf0] sm:$0xf]
    %v112 = vld [vmem:[#allocation2 + $0xf4] sm:$0xf]
    %v113 = vld [vmem:[#allocation2 + $0xf8] sm:$0xf]
    %v114 = vld [vmem:[#allocation2 + $0xfc] sm:$0xf]
    %v115 = vld [vmem:[#allocation2 + $0x100] sm:$0xf]
    %v116 = vld [vmem:[#allocation2 + $0x104] sm:$0xf]
    %v117 = vld [vmem:[#allocation2 + $0x108] sm:$0xf]
    %v118 = vld [vmem:[#allocation2 + $0x10c] sm:$0xf]
    %v119 = vld [vmem:[#allocation2 + $0x110] sm:$0xf]
    %v120 = vld [vmem:[#allocation2 + $0x114] sm:$0xf]
    %v121 = vld [vmem:[#allocation2 + $0x118] sm:$0xf]
    %v122 = vld [vmem:[#allocation2 + $0x11c] sm:$0xf]
    %v123 = vld [vmem:[#allocation2 + $0x120] sm:$0xf]
    %v124 = vld [vmem:[#allocation2 + $0x124] sm:$0xf]
    %v125 = vld [vmem:[#allocation2 + $0x128] sm:$0xf]
    %v126 = vld [vmem:[#allocation2 + $0x12c] sm:$0xf]
    %v127 = vld [vmem:[#allocation2 + $0x130] sm:$0xf]
    %v128 = vld [vmem:[#allocation2 + $0x134] sm:$0xf]
    %v129 = vld [vmem:[#allocation2 + $0x138] sm:$0xf]
    %v130 = vld [vmem:[#allocation2 + $0x13c] sm:$0xf]
    %v131 = vld [vmem:[#allocation2 + $0x140] sm:$0xf]
    %v132 = vld [vmem:[#allocation2 + $0x144] sm:$0xf]
    %v133 = vld [vmem:[#allocation2 + $0x148] sm:$0xf]
    %v134 = vld [vmem:[#allocation2 + $0x14c] sm:$0xf]
    %v135 = vld [vmem:[#allocation2 + $0x150] sm:$0xf]
    %v136 = vld [vmem:[#allocation2 + $0x154] sm:$0xf]
    %v137 = vld [vmem:[#allocation2 + $0x158] sm:$0xf]
    %v138 = vld [vmem:[#allocation2 + $0x15c] sm:$0xf]
    %v139 = vld [vmem:[#allocation2 + $0x160] sm:$0xf]
    %v140 = vld [vmem:[#allocation2 + $0x164] sm:$0xf]
    %v141 = vld [vmem:[#allocation2 + $0x168] sm:$0xf]
    %v142 = vld [vmem:[#allocation2 + $0x16c] sm:$0xf]
    %v143 = vld [vmem:[#allocation2 + $0x170] sm:$0xf]
    %v144 = vld [vmem:[#allocation2 + $0x174] sm:$0xf]
    %v145 = vld [vmem:[#allocation2 + $0x178] sm:$0xf]
    %v146 = vld [vmem:[#allocation2 + $0x17c] sm:$0xf]
    %v147 = vld [vmem:[#allocation2 + $0x180] sm:$0xf]
    %v148 = vld [vmem:[#allocation2 + $0x184] sm:$0xf]
    %v149 = vld [vmem:[#allocation2 + $0x188] sm:$0xf]
    %v150 = vld [vmem:[#allocation2 + $0x18c] sm:$0xf]
    %v151 = vld [vmem:[#allocation2 + $0x190] sm:$0xf]
    %v152 = vld [vmem:[#allocation2 + $0x194] sm:$0xf]
    %v153 = vld [vmem:[#allocation2 + $0x198] sm:$0xf]
    %v154 = vld [vmem:[#allocation2 + $0x19c] sm:$0xf]
    %v155 = vld [vmem:[#allocation2 + $0x1a0] sm:$0xf]
    %v156 = vld [vmem:[#allocation2 + $0x1a4] sm:$0xf]
    %v157 = vld [vmem:[#allocation2 + $0x1a8] sm:$0xf]
    %v158 = vld [vmem:[#allocation2 + $0x1ac] sm:$0xf]
    %v159 = vld [vmem:[#allocation2 + $0x1b0] sm:$0xf]
    %v160 = vld [vmem:[#allocation2 + $0x1b4] sm:$0xf]
    %v161 = vld [vmem:[#allocation2 + $0x1b8] sm:$0xf]
    %v162 = vld [vmem:[#allocation2 + $0x1bc] sm:$0xf]
    %v163 = vld [vmem:[#allocation2 + $0x1c0] sm:$0xf]
    %v164 = vld [vmem:[#allocation2 + $0x1c4] sm:$0xf]
    %v165 = vld [vmem:[#allocation2 + $0x1c8] sm:$0xf]
    %v166 = vld [vmem:[#allocation2 + $0x1cc] sm:$0xf]
    %v167 = vld [vmem:[#allocation2 + $0x1d0] sm:$0xf]
    %v168 = vld [vmem:[#allocation2 + $0x1d4] sm:$0xf]
    %v169 = vld [vmem:[#allocation2 + $0x1d8] sm:$0xf]
    %v170 = vld [vmem:[#allocation2 + $0x1dc] sm:$0xf]
    %v171 = vld [vmem:[#allocation2 + $0x1e0] sm:$0xf]
    %v172 = vld [vmem:[#allocation2 + $0x1e4] sm:$0xf]
    %v173 = vld [vmem:[#allocation2 + $0x1e8] sm:$0xf]
    %v174 = vld [vmem:[#allocation2 + $0x1ec] sm:$0xf]
    %v175 = vld [vmem:[#allocation2 + $0x1f0] sm:$0xf]
    %v176 = vld [vmem:[#allocation2 + $0x1f4] sm:$0xf]
    %v177 = vld [vmem:[#allocation2 + $0x1f8] sm:$0xf]
    %v178 = vld [vmem:[#allocation2 + $0x1fc] sm:$0xf]
    %v179 = vld [vmem:[%s2] sm:$0x1]
    %v181 = vlaneseq
    %v182 = vshrl.u32 %v181, 7
    %v183 = vsub.s32 0, %v182
    %v184 = vrot.slane %v179, %v183
    %v314 = vunpack.c.l.b16 %v51
    %v315 = vunpack.c.l.b16 %v52
    %v316 = vunpack.c.l.b16 %v53
    %v317 = vunpack.c.l.b16 %v54
    %v318 = vunpack.c.l.b16 %v55
    %v319 = vunpack.c.l.b16 %v56
    %v320 = vunpack.c.l.b16 %v57
    %v321 = vunpack.c.l.b16 %v58
    %v322 = vunpack.c.l.b16 %v59
    %v323 = vunpack.c.l.b16 %v60
    %v324 = vunpack.c.l.b16 %v61
    %v325 = vunpack.c.l.b16 %v62
    %v326 = vunpack.c.l.b16 %v63
    %v327 = vunpack.c.l.b16 %v64
    %v328 = vunpack.c.l.b16 %v65
    %v329 = vunpack.c.l.b16 %v66
    %v330 = vunpack.c.l.b16 %v67
    %v331 = vunpack.c.l.b16 %v68
    %v332 = vunpack.c.l.b16 %v69
    %v333 = vunpack.c.l.b16 %v70
    %v334 = vunpack.c.l.b16 %v71
    %v335 = vunpack.c.l.b16 %v72
    %v336 = vunpack.c.l.b16 %v73
    %v337 = vunpack.c.l.b16 %v74
    %v338 = vunpack.c.l.b16 %v75
    %v339 = vunpack.c.l.b16 %v76
    %v340 = vunpack.c.l.b16 %v77
    %v341 = vunpack.c.l.b16 %v78
    %v342 = vunpack.c.l.b16 %v79
    %v343 = vunpack.c.l.b16 %v80
    %v344 = vunpack.c.l.b16 %v81
    %v345 = vunpack.c.l.b16 %v82
    %v346 = vunpack.c.l.b16 %v83
    %v347 = vunpack.c.l.b16 %v84
    %v348 = vunpack.c.l.b16 %v85
    %v349 = vunpack.c.l.b16 %v86
    %v350 = vunpack.c.l.b16 %v87
    %v351 = vunpack.c.l.b16 %v88
    %v352 = vunpack.c.l.b16 %v89
    %v353 = vunpack.c.l.b16 %v90
    %v354 = vunpack.c.l.b16 %v91
    %v355 = vunpack.c.l.b16 %v92
    %v356 = vunpack.c.l.b16 %v93
    %v357 = vunpack.c.l.b16 %v94
    %v358 = vunpack.c.l.b16 %v95
    %v359 = vunpack.c.l.b16 %v96
    %v360 = vunpack.c.l.b16 %v97
    %v361 = vunpack.c.l.b16 %v98
    %v362 = vunpack.c.l.b16 %v99
    %v363 = vunpack.c.l.b16 %v100
    %v364 = vunpack.c.l.b16 %v101
    %v365 = vunpack.c.l.b16 %v102
    %v366 = vunpack.c.l.b16 %v103
    %v367 = vunpack.c.l.b16 %v104
    %v368 = vunpack.c.l.b16 %v105
    %v369 = vunpack.c.l.b16 %v106
    %v370 = vunpack.c.l.b16 %v107
    %v371 = vunpack.c.l.b16 %v108
    %v372 = vunpack.c.l.b16 %v109
    %v373 = vunpack.c.l.b16 %v110
    %v374 = vunpack.c.l.b16 %v111
    %v375 = vunpack.c.l.b16 %v112
    %v376 = vunpack.c.l.b16 %v113
    %v377 = vunpack.c.l.b16 %v114
    %v378 = vunpack.c.l.b16 %v115
    %v379 = vunpack.c.l.b16 %v116
    %v380 = vunpack.c.l.b16 %v117
    %v381 = vunpack.c.l.b16 %v118
    %v382 = vunpack.c.l.b16 %v119
    %v383 = vunpack.c.l.b16 %v120
    %v384 = vunpack.c.l.b16 %v121
    %v385 = vunpack.c.l.b16 %v122
    %v386 = vunpack.c.l.b16 %v123
    %v387 = vunpack.c.l.b16 %v124
    %v388 = vunpack.c.l.b16 %v125
    %v389 = vunpack.c.l.b16 %v126
    %v390 = vunpack.c.l.b16 %v127
    %v391 = vunpack.c.l.b16 %v128
    %v392 = vunpack.c.l.b16 %v129
    %v393 = vunpack.c.l.b16 %v130
    %v394 = vunpack.c.l.b16 %v131
    %v395 = vunpack.c.l.b16 %v132
    %v396 = vunpack.c.l.b16 %v133
    %v397 = vunpack.c.l.b16 %v134
    %v398 = vunpack.c.l.b16 %v135
    %v399 = vunpack.c.l.b16 %v136
    %v400 = vunpack.c.l.b16 %v137
    %v401 = vunpack.c.l.b16 %v138
    %v402 = vunpack.c.l.b16 %v139
    %v403 = vunpack.c.l.b16 %v140
    %v404 = vunpack.c.l.b16 %v141
    %v405 = vunpack.c.l.b16 %v142
    %v406 = vunpack.c.l.b16 %v143
    %v407 = vunpack.c.l.b16 %v144
    %v408 = vunpack.c.l.b16 %v145
    %v409 = vunpack.c.l.b16 %v146
    %v410 = vunpack.c.l.b16 %v147
    %v411 = vunpack.c.l.b16 %v148
    %v412 = vunpack.c.l.b16 %v149
    %v413 = vunpack.c.l.b16 %v150
    %v414 = vunpack.c.l.b16 %v151
    %v415 = vunpack.c.l.b16 %v152
    %v416 = vunpack.c.l.b16 %v153
    %v417 = vunpack.c.l.b16 %v154
    %v418 = vunpack.c.l.b16 %v155
    %v419 = vunpack.c.l.b16 %v156
    %v420 = vunpack.c.l.b16 %v157
    %v421 = vunpack.c.l.b16 %v158
    %v422 = vunpack.c.l.b16 %v159
    %v423 = vunpack.c.l.b16 %v160
    %v424 = vunpack.c.l.b16 %v161
    %v425 = vunpack.c.l.b16 %v162
    %v426 = vunpack.c.l.b16 %v163
    %v427 = vunpack.c.l.b16 %v164
    %v428 = vunpack.c.l.b16 %v165
    %v429 = vunpack.c.l.b16 %v166
    %v430 = vunpack.c.l.b16 %v167
    %v431 = vunpack.c.l.b16 %v168
    %v432 = vunpack.c.l.b16 %v169
    %v433 = vunpack.c.l.b16 %v170
    %v434 = vunpack.c.l.b16 %v171
    %v435 = vunpack.c.l.b16 %v172
    %v436 = vunpack.c.l.b16 %v173
    %v437 = vunpack.c.l.b16 %v174
    %v438 = vunpack.c.l.b16 %v175
    %v439 = vunpack.c.l.b16 %v176
    %v440 = vunpack.c.l.b16 %v177
    %v441 = vunpack.c.l.b16 %v178
    %v442 = vpack.c.b16 %v315, %v314
    %v443 = vpack.c.b16 %v317, %v316
    %v444 = vpack.c.b16 %v319, %v318
    %v445 = vpack.c.b16 %v321, %v320
    %v446 = vpack.c.b16 %v323, %v322
    %v447 = vpack.c.b16 %v325, %v324
    %v448 = vpack.c.b16 %v327, %v326
    %v449 = vpack.c.b16 %v329, %v328
    %v450 = vpack.c.b16 %v331, %v330
    %v451 = vpack.c.b16 %v333, %v332
    %v452 = vpack.c.b16 %v335, %v334
    %v453 = vpack.c.b16 %v337, %v336
    %v454 = vpack.c.b16 %v339, %v338
    %v455 = vpack.c.b16 %v341, %v340
    %v456 = vpack.c.b16 %v343, %v342
    %v457 = vpack.c.b16 %v345, %v344
    %v458 = vpack.c.b16 %v347, %v346
    %v459 = vpack.c.b16 %v349, %v348
    %v460 = vpack.c.b16 %v351, %v350
    %v461 = vpack.c.b16 %v353, %v352
    %v462 = vpack.c.b16 %v355, %v354
    %v463 = vpack.c.b16 %v357, %v356
    %v464 = vpack.c.b16 %v359, %v358
    %v465 = vpack.c.b16 %v361, %v360
    %v466 = vpack.c.b16 %v363, %v362
    %v467 = vpack.c.b16 %v365, %v364
    %v468 = vpack.c.b16 %v367, %v366
    %v469 = vpack.c.b16 %v369, %v368
    %v470 = vpack.c.b16 %v371, %v370
    %v471 = vpack.c.b16 %v373, %v372
    %v472 = vpack.c.b16 %v375, %v374
    %v473 = vpack.c.b16 %v377, %v376
    %v474 = vpack.c.b16 %v379, %v378
    %v475 = vpack.c.b16 %v381, %v380
    %v476 = vpack.c.b16 %v383, %v382
    %v477 = vpack.c.b16 %v385, %v384
    %v478 = vpack.c.b16 %v387, %v386
    %v479 = vpack.c.b16 %v389, %v388
    %v480 = vpack.c.b16 %v391, %v390
    %v481 = vpack.c.b16 %v393, %v392
    %v482 = vpack.c.b16 %v395, %v394
    %v483 = vpack.c.b16 %v397, %v396
    %v484 = vpack.c.b16 %v399, %v398
    %v485 = vpack.c.b16 %v401, %v400
    %v486 = vpack.c.b16 %v403, %v402
    %v487 = vpack.c.b16 %v405, %v404
    %v488 = vpack.c.b16 %v407, %v406
    %v489 = vpack.c.b16 %v409, %v408
    %v490 = vpack.c.b16 %v411, %v410
    %v491 = vpack.c.b16 %v413, %v412
    %v492 = vpack.c.b16 %v415, %v414
    %v493 = vpack.c.b16 %v417, %v416
    %v494 = vpack.c.b16 %v419, %v418
    %v495 = vpack.c.b16 %v421, %v420
    %v496 = vpack.c.b16 %v423, %v422
    %v497 = vpack.c.b16 %v425, %v424
    %v498 = vpack.c.b16 %v427, %v426
    %v499 = vpack.c.b16 %v429, %v428
    %v500 = vpack.c.b16 %v431, %v430
    %v501 = vpack.c.b16 %v433, %v432
    %v502 = vpack.c.b16 %v435, %v434
    %v503 = vpack.c.b16 %v437, %v436
    %v504 = vpack.c.b16 %v439, %v438
    %v505 = vpack.c.b16 %v441, %v440
    %570 = vmatprep.subr.bf16.mxu0 0
    %571 = vmatpush1.bf16.msra.mxu0 %v449
    %572 = vmatprep.subr.bf16.mxu0 0
    %573 = vmatpush1.bf16.msra.mxu0 %v448
    %574 = vmatprep.subr.bf16.mxu0 0
    %575 = vmatpush1.bf16.msra.mxu0 %v447
    %576 = vmatprep.subr.bf16.mxu0 0
    %577 = vmatpush1.bf16.msra.mxu0 %v446
    %578 = vmatprep.subr.bf16.mxu0 0
    %579 = vmatpush1.bf16.msra.mxu0 %v445
    %580 = vmatprep.subr.bf16.mxu0 0
    %581 = vmatpush1.bf16.msra.mxu0 %v444
    %582 = vmatprep.subr.bf16.mxu0 0
    %583 = vmatpush1.bf16.msra.mxu0 %v443
    %584 = vmatprep.subr.bf16.mxu0 0
    %585 = vmatpush1.bf16.msra.mxu0 %v442
    %586 = vmatprep.subr.bf16.mxu0 0
    %587 = vmatpush2.bf16.msra.mxu0 %v457
    %588 = vmatprep.subr.bf16.mxu0 0
    %589 = vmatpush2.bf16.msra.mxu0 %v456
    %590 = vmatprep.subr.bf16.mxu0 0
    %591 = vmatpush2.bf16.msra.mxu0 %v455
    %592 = vmatprep.subr.bf16.mxu0 0
    %593 = vmatpush2.bf16.msra.mxu0 %v454
    %594 = vmatprep.subr.bf16.mxu0 0
    %595 = vmatpush2.bf16.msra.mxu0 %v453
    %596 = vmatprep.subr.bf16.mxu0 0
    %597 = vmatpush2.bf16.msra.mxu0 %v452
    %598 = vmatprep.subr.bf16.mxu0 0
    %599 = vmatpush2.bf16.msra.mxu0 %v451
    %600 = vmatprep.subr.bf16.mxu0 0
    %601 = vmatpush2.bf16.msra.mxu0 %v450
    %602 = vmatprep.mubr.bf16.mxu0 %v44
    %603 = vmatmul.mubr.bf16.gmra.mxu0 %v43
    %v604 = vpop.f32.mrf.mxu0
    %v605 = vadd.f32 %v184, %v604
    %v606 = vpop.f32.mrf.mxu0
    %v607 = vpop.f32.mrf.mxu0
    %v608 = vpop.f32.mrf.mxu0
    %609 = vdwg.mxu0
    %610 = vmatprep.subr.bf16.mxu0 0
    %611 = vmatpush1.bf16.msra.mxu0 %v465
    %612 = vmatprep.subr.bf16.mxu0 0
    %613 = vmatpush1.bf16.msra.mxu0 %v464
    %614 = vmatprep.subr.bf16.mxu0 0
    %615 = vmatpush1.bf16.msra.mxu0 %v463
    %616 = vmatprep.subr.bf16.mxu0 0
    %617 = vmatpush1.bf16.msra.mxu0 %v462
    %618 = vmatprep.subr.bf16.mxu0 0
    %619 = vmatpush1.bf16.msra.mxu0 %v461
    %620 = vmatprep.subr.bf16.mxu0 0
    %621 = vmatpush1.bf16.msra.mxu0 %v460
    %622 = vmatprep.subr.bf16.mxu0 0
    %623 = vmatpush1.bf16.msra.mxu0 %v459
    %624 = vmatprep.subr.bf16.mxu0 0
    %625 = vmatpush1.bf16.msra.mxu0 %v458
    %626 = vmatprep.subr.bf16.mxu0 0
    %627 = vmatpush2.bf16.msra.mxu0 %v473
    %628 = vmatprep.subr.bf16.mxu0 0
    %629 = vmatpush2.bf16.msra.mxu0 %v472
    %630 = vmatprep.subr.bf16.mxu0 0
    %631 = vmatpush2.bf16.msra.mxu0 %v471
    %632 = vmatprep.subr.bf16.mxu0 0
    %633 = vmatpush2.bf16.msra.mxu0 %v470
    %634 = vmatprep.subr.bf16.mxu0 0
    %635 = vmatpush2.bf16.msra.mxu0 %v469
    %636 = vmatprep.subr.bf16.mxu0 0
    %637 = vmatpush2.bf16.msra.mxu0 %v468
    %638 = vmatprep.subr.bf16.mxu0 0
    %639 = vmatpush2.bf16.msra.mxu0 %v467
    %640 = vmatprep.subr.bf16.mxu0 0
    %641 = vmatpush2.bf16.msra.mxu0 %v466
    %642 = vmatprep.mubr.bf16.mxu0 %v46
    %643 = vmatmul.mubr.bf16.gmra.mxu0 %v45
    %v644 = vpop.f32.mrf.mxu0
    %v645 = vadd.f32 %v605, %v644
    %v646 = vpop.f32.mrf.mxu0
    %v647 = vpop.f32.mrf.mxu0
    %v648 = vpop.f32.mrf.mxu0
    %649 = vdwg.mxu0
    %650 = vmatprep.subr.bf16.mxu0 0
    %651 = vmatpush1.bf16.msra.mxu0 %v481
    %652 = vmatprep.subr.bf16.mxu0 0
    %653 = vmatpush1.bf16.msra.mxu0 %v480
    %654 = vmatprep.subr.bf16.mxu0 0
    %655 = vmatpush1.bf16.msra.mxu0 %v479
    %656 = vmatprep.subr.bf16.mxu0 0
    %657 = vmatpush1.bf16.msra.mxu0 %v478
    %658 = vmatprep.subr.bf16.mxu0 0
    %659 = vmatpush1.bf16.msra.mxu0 %v477
    %660 = vmatprep.subr.bf16.mxu0 0
    %661 = vmatpush1.bf16.msra.mxu0 %v476
    %662 = vmatprep.subr.bf16.mxu0 0
    %663 = vmatpush1.bf16.msra.mxu0 %v475
    %664 = vmatprep.subr.bf16.mxu0 0
    %665 = vmatpush1.bf16.msra.mxu0 %v474
    %666 = vmatprep.subr.bf16.mxu0 0
    %667 = vmatpush2.bf16.msra.mxu0 %v489
    %668 = vmatprep.subr.bf16.mxu0 0
    %669 = vmatpush2.bf16.msra.mxu0 %v488
    %670 = vmatprep.subr.bf16.mxu0 0
    %671 = vmatpush2.bf16.msra.mxu0 %v487
    %672 = vmatprep.subr.bf16.mxu0 0
    %673 = vmatpush2.bf16.msra.mxu0 %v486
    %674 = vmatprep.subr.bf16.mxu0 0
    %675 = vmatpush2.bf16.msra.mxu0 %v485
    %676 = vmatprep.subr.bf16.mxu0 0
    %677 = vmatpush2.bf16.msra.mxu0 %v484
    %678 = vmatprep.subr.bf16.mxu0 0
    %679 = vmatpush2.bf16.msra.mxu0 %v483
    %680 = vmatprep.subr.bf16.mxu0 0
    %681 = vmatpush2.bf16.msra.mxu0 %v482
    %682 = vmatprep.mubr.bf16.mxu0 %v48
    %683 = vmatmul.mubr.bf16.gmra.mxu0 %v47
    %v684 = vpop.f32.mrf.mxu0
    %v685 = vadd.f32 %v645, %v684
    %v686 = vpop.f32.mrf.mxu0
    %v687 = vpop.f32.mrf.mxu0
    %v688 = vpop.f32.mrf.mxu0
    %689 = vdwg.mxu0
    %690 = vmatprep.subr.bf16.mxu0 0
    %691 = vmatpush1.bf16.msra.mxu0 %v497
    %692 = vmatprep.subr.bf16.mxu0 0
    %693 = vmatpush1.bf16.msra.mxu0 %v496
    %694 = vmatprep.subr.bf16.mxu0 0
    %695 = vmatpush1.bf16.msra.mxu0 %v495
    %696 = vmatprep.subr.bf16.mxu0 0
    %697 = vmatpush1.bf16.msra.mxu0 %v494
    %698 = vmatprep.subr.bf16.mxu0 0
    %699 = vmatpush1.bf16.msra.mxu0 %v493
    %700 = vmatprep.subr.bf16.mxu0 0
    %701 = vmatpush1.bf16.msra.mxu0 %v492
    %702 = vmatprep.subr.bf16.mxu0 0
    %703 = vmatpush1.bf16.msra.mxu0 %v491
    %704 = vmatprep.subr.bf16.mxu0 0
    %705 = vmatpush1.bf16.msra.mxu0 %v490
    %706 = vmatprep.subr.bf16.mxu0 0
    %707 = vmatpush2.bf16.msra.mxu0 %v505
    %708 = vmatprep.subr.bf16.mxu0 0
    %709 = vmatpush2.bf16.msra.mxu0 %v504
    %710 = vmatprep.subr.bf16.mxu0 0
    %711 = vmatpush2.bf16.msra.mxu0 %v503
    %712 = vmatprep.subr.bf16.mxu0 0
    %713 = vmatpush2.bf16.msra.mxu0 %v502
    %714 = vmatprep.subr.bf16.mxu0 0
    %715 = vmatpush2.bf16.msra.mxu0 %v501
    %716 = vmatprep.subr.bf16.mxu0 0
    %717 = vmatpush2.bf16.msra.mxu0 %v500
    %718 = vmatprep.subr.bf16.mxu0 0
    %719 = vmatpush2.bf16.msra.mxu0 %v499
    %720 = vmatprep.subr.bf16.mxu0 0
    %721 = vmatpush2.bf16.msra.mxu0 %v498
    %722 = vmatprep.mubr.bf16.mxu0 %v50
    %723 = vmatmul.mubr.bf16.gmra.mxu0 %v49
    %v724 = vpop.f32.mrf.mxu0
    %v725 = vadd.f32 %v685, %v724
    %v726 = vpop.f32.mrf.mxu0
    %v727 = vpop.f32.mrf.mxu0
    %v728 = vpop.f32.mrf.mxu0
    %729 = vdwg.mxu0
    %v730 = vmul.f32 %v725, 0.5
    %v731 = vmul.f32 %v725, 0.70710677
    %v732 = verf.f32.pop %v731
    %v733 = vadd.f32 %v732, 1.0
    %v734 = vmul.f32 %v730, %v733
    %v735 = vpack.c.bf16 %v734, %v734
    %v736 = vld [vmem:[%s3] sm:$0xf]
    %v737 = vld [vmem:[%s3 + $0x4] sm:$0xf]
    %v738 = vld [vmem:[%s3 + $0x8] sm:$0xf]
    %v739 = vld [vmem:[%s3 + $0xc] sm:$0xf]
    %v740 = vld [vmem:[%s3 + $0x10] sm:$0xf]
    %v741 = vld [vmem:[%s3 + $0x14] sm:$0xf]
    %v742 = vld [vmem:[%s3 + $0x18] sm:$0xf]
    %v743 = vld [vmem:[%s3 + $0x1c] sm:$0xf]
    %v744 = vld [vmem:[%s3 + $0x20] sm:$0xf]
    %v745 = vld [vmem:[%s3 + $0x24] sm:$0xf]
    %v746 = vld [vmem:[%s3 + $0x28] sm:$0xf]
    %v747 = vld [vmem:[%s3 + $0x2c] sm:$0xf]
    %v748 = vld [vmem:[%s3 + $0x30] sm:$0xf]
    %v749 = vld [vmem:[%s3 + $0x34] sm:$0xf]
    %v750 = vld [vmem:[%s3 + $0x38] sm:$0xf]
    %v751 = vld [vmem:[%s3 + $0x3c] sm:$0xf]
    %v752 = vld [vmem:[%s4] sm:$0x1]
    %v754 = vlaneseq
    %v755 = vshrl.u32 %v754, 7
    %v756 = vsub.s32 0, %v755
    %v757 = vrot.slane %v752, %v756
    %v775 = vunpack.c.l.b16 %v736
    %v776 = vunpack.c.l.b16 %v737
    %v777 = vunpack.c.l.b16 %v738
    %v778 = vunpack.c.l.b16 %v739
    %v779 = vunpack.c.l.b16 %v740
    %v780 = vunpack.c.l.b16 %v741
    %v781 = vunpack.c.l.b16 %v742
    %v782 = vunpack.c.l.b16 %v743
    %v783 = vunpack.c.l.b16 %v744
    %v784 = vunpack.c.l.b16 %v745
    %v785 = vunpack.c.l.b16 %v746
    %v786 = vunpack.c.l.b16 %v747
    %v787 = vunpack.c.l.b16 %v748
    %v788 = vunpack.c.l.b16 %v749
    %v789 = vunpack.c.l.b16 %v750
    %v790 = vunpack.c.l.b16 %v751
    %v791 = vpack.c.b16 %v776, %v775
    %v792 = vpack.c.b16 %v778, %v777
    %v793 = vpack.c.b16 %v780, %v779
    %v794 = vpack.c.b16 %v782, %v781
    %v795 = vpack.c.b16 %v784, %v783
    %v796 = vpack.c.b16 %v786, %v785
    %v797 = vpack.c.b16 %v788, %v787
    %v798 = vpack.c.b16 %v790, %v789
    %807 = vmatprep.subr.bf16.mxu0 0
    %808 = vmatpush1.bf16.msra.mxu0 %v798
    %809 = vmatprep.subr.bf16.mxu0 0
    %810 = vmatpush1.bf16.msra.mxu0 %v797
    %811 = vmatprep.subr.bf16.mxu0 0
    %812 = vmatpush1.bf16.msra.mxu0 %v796
    %813 = vmatprep.subr.bf16.mxu0 0
    %814 = vmatpush1.bf16.msra.mxu0 %v795
    %815 = vmatprep.subr.bf16.mxu0 0
    %816 = vmatpush1.bf16.msra.mxu0 %v794
    %817 = vmatprep.subr.bf16.mxu0 0
    %818 = vmatpush1.bf16.msra.mxu0 %v793
    %819 = vmatprep.subr.bf16.mxu0 0
    %820 = vmatpush1.bf16.msra.mxu0 %v792
    %821 = vmatprep.subr.bf16.mxu0 0
    %822 = vmatpush1.bf16.msra.mxu0 %v791
    %823 = vmatprep.subr.bf16.mxu0 0
    %824 = vmatpush2.bf16.msra.mxu0 0
    %825 = vmatprep.subr.bf16.mxu0 0
    %826 = vmatpush2.bf16.msra.mxu0 0
    %827 = vmatprep.subr.bf16.mxu0 0
    %828 = vmatpush2.bf16.msra.mxu0 0
    %829 = vmatprep.subr.bf16.mxu0 0
    %830 = vmatpush2.bf16.msra.mxu0 0
    %831 = vmatprep.subr.bf16.mxu0 0
    %832 = vmatpush2.bf16.msra.mxu0 0
    %833 = vmatprep.subr.bf16.mxu0 0
    %834 = vmatpush2.bf16.msra.mxu0 0
    %835 = vmatprep.subr.bf16.mxu0 0
    %836 = vmatpush2.bf16.msra.mxu0 0
    %837 = vmatprep.subr.bf16.mxu0 0
    %838 = vmatpush2.bf16.msra.mxu0 0
    %839 = vmatprep.mubr.bf16.mxu0 0
    %840 = vmatmul.mubr.bf16.gmra.mxu0 %v735
    %v841 = vpop.f32.mrf.mxu0
    %v842 = vadd.f32 %v757, %v841
    %v843 = vpop.f32.mrf.mxu0
    %v844 = vpop.f32.mrf.mxu0
    %v845 = vpop.f32.mrf.mxu0
    %846 = vdwg.mxu0
    %847 = vst [vmem:[%s5] sm:$0xff] %v842
    // Predicated region
    $region26: #{embed_fc.1} parent=1 // pred_check
      _
    $region27: #{embed_fc.1} parent=1 // pred_check_branch
      %849 = sbr.rel (0) target = $region29
    $region28: #{embed_fc.1} parent=1 // pred_region
      _
    $region29: #{embed_fc.1} parent=1 // pred_fallthru
      _
    // Predicated region
    $region30: #{embed_fc.1} parent=1 // pred_check
      _
    $region31: #{embed_fc.1} parent=1 // pred_check_branch
      %851 = sbr.rel (0) target = $region33
    $region32: #{embed_fc.1} parent=1 // pred_region
      _
    $region33: #{embed_fc.1} parent=1 // pred_fallthru
      _
    %852 = vsyncpa [#allocation3], 1

</llo_original>
